<compile_context>
chip_gen: v7x
topology: tpu7x:2x2x1
jax: 0.10.0
libtpu: 0.0.40
codegen_flags: <defaults>
</compile_context>

<pallas_src>
import jax
import jax.numpy as jnp
from jax.experimental import pallas as pl
from jax.experimental.pallas import tpu as pltpu


def _materialize_copy_kernel(src_hbm, dst_hbm, sem):
    # Whole-array HBM -> HBM copy via one async DMA; no VMEM round trip.
    cp = pltpu.make_async_copy(src_hbm, dst_hbm, sem)
    cp.start()
    cp.wait()


def none_comm_forward(msg: jax.Array, *, force_materialize: bool = False, **kwargs) -> jax.Array:
    """NoneComm.forward(msg, **kwargs) -> msg (identity).

    Default path returns msg untouched (the only correct "optimization" for an
    identity).  With force_materialize=True a Pallas kernel produces a fresh
    buffer holding the same bytes via a single HBM->HBM DMA.
    """
    if not force_materialize or msg.size == 0:
        return msg

    return pl.pallas_call(
        _materialize_copy_kernel,
        out_shape=jax.ShapeDtypeStruct(msg.shape, msg.dtype),
        in_specs=[pl.BlockSpec(memory_space=pl.ANY)],
        out_specs=pl.BlockSpec(memory_space=pl.ANY),
        scratch_shapes=[pltpu.SemaphoreType.DMA(())],
    )(msg)


if __name__ == "__main__":
    key = jax.random.PRNGKey(0)
    k1, k2 = jax.random.split(key)

    # Default path: unconditional identity bypass (batch=2, agents=4, hidden=32).
    msg_small = jax.random.normal(k1, (2, 4, 32), dtype=jnp.float32)
    out_small = none_comm_forward(msg_small)
    jax.block_until_ready(out_small)
    assert out_small.shape == msg_small.shape and out_small.dtype == msg_small.dtype
    assert bool(jnp.all(out_small == msg_small))

    # Explicit force-materialize path: Pallas single HBM->HBM DMA copy kernel.
    msg_big = jax.random.normal(k2, (16, 8, 128), dtype=jnp.float32)
    out_big = none_comm_forward(msg_big, force_materialize=True)
    jax.block_until_ready(out_big)
    assert out_big.shape == msg_big.shape and out_big.dtype == msg_big.dtype
    assert bool(jnp.all(out_big == msg_big))

    # Small / oddly-shaped input also works through the kernel path (no tiling
    # constraints since there is no block_shape).
    out_small_mat = none_comm_forward(msg_small, force_materialize=True)
    jax.block_until_ready(out_small_mat)
    assert bool(jnp.all(out_small_mat == msg_small))

    print("KERNEL_OK")
</pallas_src>

<mosaic_0001>
module attributes {stable_mosaic.version = 11 : i64} {
  func.func @_materialize_copy_kernel(%arg0: memref<16x8x128xf32, #tpu.memory_space<any>>, %arg1: memref<16x8x128xf32, #tpu.memory_space<any>>, %arg2: memref<!tpu.dma_semaphore, #tpu.memory_space<semaphore_mem>>) attributes {dimension_semantics = [], scalar_prefetch = 0 : i64, scratch_operands = 1 : i64, tpu.core_type = #tpu.core_type<tc>} {
    tpu.enqueue_dma source(%arg0 : memref<16x8x128xf32, #tpu.memory_space<any>>) target(%arg1 : memref<16x8x128xf32, #tpu.memory_space<any>>) target_semaphore(%arg2 : memref<!tpu.dma_semaphore, #tpu.memory_space<semaphore_mem>>)
    tpu.wait_dma2 semaphore(%arg2 : memref<!tpu.dma_semaphore, #tpu.memory_space<semaphore_mem>>) src(%arg0 : memref<16x8x128xf32, #tpu.memory_space<any>>) dst(%arg1 : memref<16x8x128xf32, #tpu.memory_space<any>>)
    return
  }
}

</mosaic_0001>

<llo_original>
// kernel: tpu_custom_call.1
$region0: #{tpu_custom_call.1}
  #allocation0 [shape = 'u32[]', space=smem, size = 0x4, offset = 0x4, fixed_abs, tag = 'smem constant byte address 0x4 - core index']
  #allocation1 [shape = 'u32[144,128]{1,0:T(1,128)}', space=vmem, size = 0x12000, scoped, tag = 'internal scratch']
  #allocation2 [shape = 's32[1]{0}', space=sflag, size = 0x4, scoped, tag = 'scratch operand']
  #allocation3 [shape = 's32[]', space=sflag, size = 0x4, offset = 0, fixed_abs, tag = 'sflag constant byte address 0x0 - dummy sync flag']
  #allocation4 [shape = 'u32[0]{0}', space=smem, size = 0, offset = 0, fixed_abs, tag = 'smem constant byte address 0x0 - null']
  %s0 = inlined_call_operand.hbm [shape: f32[16,8,128], index: 0, kind: input, shape index: {}]
  %s1 = inlined_call_operand.hbm [shape: f32[16,8,128], index: 1, kind: output, shape index: {}]
  %s2 = sld [smem:[#allocation0]]
  $region2: #{tpu_custom_call.1} parent=0
    _
  %s4 = ssub.s32 1, %s2
  %s5 = scalar_select 0, %s4, %s2
  %s7 = sshll.u32 1, 14
  %s8 = sxor.u32 4294967295, %s7
  %s11 = sshll.u32 3, 24
  %s12 = sxor.u32 4294967295, %s11
  %s13 = sand.u32 0, %s12
  %s15 = sor.u32 %s13, 0
  %18 = dma.general %s0, 2048, %s1, [#allocation2], [#allocation3], [#allocation4], %s15, 0
  %s19 = smul.u32 16, 8
  %s20 = smul.u32 %s19, 1
  %s21 = sshll.u32 %s20, 4
  %22 = dma.done [#allocation2], %s21
  %23 = vsyncmov [#allocation2]
  %s24 = vpop.sfrf %23
  %p25 = scmp.eq.s32.totalorder %s24, 0
  %p26 = pneg %p25
  %28 = shalt.err (%p26)

</llo_original>
